<compile_context>
chip_gen: v7x
topology: tpu7x:2x2x1
jax: 0.10.0
libtpu: 0.0.40
codegen_flags: <defaults>
</compile_context>

<pallas_src>
import math
from functools import partial

import jax
import jax.numpy as jnp
from jax.experimental import pallas as pl
from jax.experimental.pallas import tpu as pltpu


def _round_up(x: int, m: int) -> int:
    return ((x + m - 1) // m) * m


def _pad_to(a, target_shape):
    pads = [(0, t - s) for s, t in zip(a.shape, target_shape)]
    if any(hi for _, hi in pads):
        a = jnp.pad(a, pads)
    return a


def _pick_tile(total: int, cap: int) -> int:
    """Largest multiple of 128 that divides `total` (itself a 128-multiple) and is <= cap."""
    if total <= cap:
        return total
    t = (cap // 128) * 128
    while t > 128:
        if total % t == 0:
            return t
        t -= 128
    return 128


def _vmem_capacity_bytes() -> int:
    try:
        return int(pltpu.get_tpu_info().vmem_capacity_bytes)
    except Exception:
        return 64 * 1024 * 1024  # conservative fallback (v7x-sized)


def _vmem_limit_bytes(plan_bytes: int, vmem_cap: int) -> int:
    # 25% headroom over the static tile plan, floored at the 32 MiB default and
    # capped comfortably below physical VMEM.
    want = plan_bytes * 5 // 4 + (2 << 20)
    hi = max(vmem_cap - (16 << 20), 32 << 20)
    return int(min(max(want, 32 << 20), hi))


# ---------------------------------------------------------------------------
# Pass 1: support = x @ W        grid = (row_tile i, fout_tile j, batch b, fin_tile kf)
# ---------------------------------------------------------------------------
def _support_kernel(x_ref, w_ref, o_ref, acc_ref, *, cast_bf16: bool):
    kf = pl.program_id(3)

    @pl.when(kf == 0)
    def _init():
        acc_ref[...] = jnp.zeros_like(acc_ref)

    a = x_ref[...]
    b = w_ref[...]
    if cast_bf16:
        a = a.astype(jnp.bfloat16)
        b = b.astype(jnp.bfloat16)
    acc_ref[...] += jnp.dot(a, b, preferred_element_type=jnp.float32)

    @pl.when(kf == pl.num_programs(3) - 1)
    def _finalize():
        o_ref[...] = acc_ref[...].astype(o_ref.dtype)


# ---------------------------------------------------------------------------
# Pass 2: out = adj @ support (+bias)   grid = (row_tile i, fout_tile j, batch b, col_tile k)
# ---------------------------------------------------------------------------
def _aggregate_kernel(*refs, has_bias: bool):
    if has_bias:
        adj_ref, s_ref, b_ref, o_ref, acc_ref = refs
    else:
        adj_ref, s_ref, o_ref, acc_ref = refs
        b_ref = None

    k = pl.program_id(3)

    @pl.when(k == 0)
    def _init():
        acc_ref[...] = jnp.zeros_like(acc_ref)

    acc_ref[...] += jnp.dot(adj_ref[...], s_ref[...],
                            preferred_element_type=jnp.float32)

    @pl.when(k == pl.num_programs(3) - 1)
    def _finalize():
        out = acc_ref[...]
        if has_bias:
            out = out + b_ref[...].astype(jnp.float32)
        o_ref[...] = out.astype(o_ref.dtype)


def graph_convolution(x, adj, weight, bias=None, *, use_bf16_operands=False):
    """Pallas forward of GraphConvolution.

    x:      (B, N, Fin)
    adj:    (B, N, N)
    weight: (Fin, Fout)
    bias:   optional (1, 1, Fout)
    use_bf16_operands: store adj / support in bf16 and feed the MXU bf16
      operands (f32 accumulation). ~2x less HBM traffic on the dominant
      streams; small precision tradeoff (fine for normalized adjacency).
    """
    B, N, Fin = x.shape
    assert adj.shape == (B, N, N)
    assert weight.shape[0] == Fin
    Fout = weight.shape[1]
    out_dtype = x.dtype

    # ---- padded sizes (lane / contraction dims aligned to 128) -------------
    N_p = _round_up(N, 128)
    Fin_p = _round_up(Fin, 128)
    Fout_p = _round_up(Fout, 128)

    # ---- dtypes -------------------------------------------------------------
    adj_dtype = jnp.bfloat16 if use_bf16_operands else adj.dtype
    sup_dtype = jnp.bfloat16 if use_bf16_operands else jnp.promote_types(x.dtype, weight.dtype)
    adj_bytes = jnp.dtype(adj_dtype).itemsize
    sup_bytes = jnp.dtype(sup_dtype).itemsize
    x_bytes = jnp.dtype(x.dtype).itemsize
    out_bytes = jnp.dtype(out_dtype).itemsize

    # ---- tiling plan --------------------------------------------------------
    vmem_cap = _vmem_capacity_bytes()
    adj_tile_cap = 1024 if vmem_cap >= 96 * 1024 * 1024 else 512  # v5e/v6e vs v7x
    if N_p <= 1024:
        t = N_p                               # single adj tile; avoids padding blowup
    else:
        t = _pick_tile(N_p, adj_tile_cap)
    tm = tk = t
    tn = _pick_tile(Fout_p, 512)              # Fout tile (lane-dense, bounded VMEM)
    tkf = _pick_tile(Fin_p, 512)              # Fin tile (bounds resident weight slice)

    nm = N_p // tm
    nn = Fout_p // tn
    nk = N_p // tk
    nkf = Fin_p // tkf

    # Give the leading "parallel" axes >= 2 iterations so both v7x TensorCores
    # get work for a single small-batch graph.  Harmless on v5e/v6e.
    if B * nm * nn == 1 and N_p >= 256:
        tm = _pick_tile(N_p, N_p // 2)
        nm = N_p // tm

    # ---- padded / casted operands -------------------------------------------
    x_p = _pad_to(x, (B, N_p, Fin_p))
    adj_p = _pad_to(adj, (B, N_p, N_p)).astype(adj_dtype)
    w_p = _pad_to(weight, (Fin_p, Fout_p))

    has_bias = bias is not None
    if has_bias:
        b_p = _pad_to(bias.reshape(1, Fout), (1, Fout_p)).astype(jnp.float32)

    # =========================================================================
    # Pass 1: support = x @ W     -> (B, N_p, Fout_p) in sup_dtype
    # =========================================================================
    plan1 = (2 * (tm * tkf * x_bytes + tkf * tn * 4 + tm * tn * sup_bytes)
             + tm * tn * 4)
    cost1 = pl.CostEstimate(
        flops=2 * B * N_p * Fin_p * Fout_p,
        transcendentals=0,
        bytes_accessed=(B * N_p * Fin_p * x_bytes * nn        # x (refetched per Fout tile)
                        + Fin_p * Fout_p * 4 * B * nm          # W (refetched per batch/row tile)
                        + B * N_p * Fout_p * sup_bytes))       # support out

    support = pl.pallas_call(
        partial(_support_kernel, cast_bf16=use_bf16_operands),
        out_shape=jax.ShapeDtypeStruct((B, N_p, Fout_p), sup_dtype),
        grid_spec=pltpu.PrefetchScalarGridSpec(
            num_scalar_prefetch=0,
            grid=(nm, nn, B, nkf),
            in_specs=[
                pl.BlockSpec((pl.Squeezed(), tm, tkf),
                             lambda i, j, b, kf: (b, i, kf)),
                pl.BlockSpec((tkf, tn), lambda i, j, b, kf: (kf, j)),
            ],
            out_specs=pl.BlockSpec((pl.Squeezed(), tm, tn),
                                   lambda i, j, b, kf: (b, i, j)),
            scratch_shapes=[pltpu.VMEM((tm, tn), jnp.float32)],
        ),
        compiler_params=pltpu.CompilerParams(
            dimension_semantics=("parallel", "parallel", "parallel", "arbitrary"),
            vmem_limit_bytes=_vmem_limit_bytes(plan1, vmem_cap),
        ),
        cost_estimate=cost1,
    )(x_p, w_p)

    # =========================================================================
    # Pass 2: out = adj @ support (+ bias)   -> (B, N_p, Fout_p)
    # =========================================================================
    plan2 = (2 * (tm * tk * adj_bytes + tk * tn * sup_bytes + tm * tn * out_bytes
                  + (tn * 4 if has_bias else 0))
             + tm * tn * 4)
    cost2 = pl.CostEstimate(
        flops=2 * B * N_p * N_p * Fout_p,
        transcendentals=0,
        bytes_accessed=(B * N_p * N_p * adj_bytes * nn         # adj (refetched per Fout tile)
                        + B * N_p * Fout_p * sup_bytes * nm    # support (refetched per row tile)
                        + B * N_p * Fout_p * out_bytes))       # output

    in_specs = [
        pl.BlockSpec((pl.Squeezed(), tm, tk), lambda i, j, b, k: (b, i, k)),
        pl.BlockSpec((pl.Squeezed(), tk, tn), lambda i, j, b, k: (b, k, j)),
    ]
    operands = [adj_p, support]
    if has_bias:
        in_specs.append(pl.BlockSpec((1, tn), lambda i, j, b, k: (0, j)))
        operands.append(b_p)

    out_p = pl.pallas_call(
        partial(_aggregate_kernel, has_bias=has_bias),
        out_shape=jax.ShapeDtypeStruct((B, N_p, Fout_p), out_dtype),
        grid_spec=pltpu.PrefetchScalarGridSpec(
            num_scalar_prefetch=0,
            grid=(nm, nn, B, nk),
            in_specs=in_specs,
            out_specs=pl.BlockSpec((pl.Squeezed(), tm, tn),
                                   lambda i, j, b, k: (b, i, j)),
            scratch_shapes=[pltpu.VMEM((tm, tn), jnp.float32)],
        ),
        compiler_params=pltpu.CompilerParams(
            dimension_semantics=("parallel", "parallel", "parallel", "arbitrary"),
            vmem_limit_bytes=_vmem_limit_bytes(plan2, vmem_cap),
        ),
        cost_estimate=cost2,
    )(*operands)

    # Slice padding back off.
    return out_p[:, :N, :Fout]


if __name__ == "__main__":
    # Small shapes consistent with a GCN layer applied to batched node features.
    B, N, Fin, Fout = 2, 8, 16, 32

    key = jax.random.PRNGKey(0)
    kx, kadj, kw, kb = jax.random.split(key, 4)

    x = jax.random.normal(kx, (B, N, Fin), dtype=jnp.float32)
    adj = jax.random.uniform(kadj, (B, N, N), dtype=jnp.float32)

    # Deterministic parameter init mirroring reset_parameters():
    # uniform(-stdv, stdv), stdv = 1 / sqrt(out_features)
    stdv = 1.0 / math.sqrt(Fout)
    weight = jax.random.uniform(kw, (Fin, Fout), dtype=jnp.float32,
                                minval=-stdv, maxval=stdv)
    bias = jax.random.uniform(kb, (1, 1, Fout), dtype=jnp.float32,
                              minval=-stdv, maxval=stdv)

    ref_nb = jnp.matmul(adj, jnp.matmul(x, weight))
    ref_b = ref_nb + bias

    # bias=False path (module default).
    out_nb = jax.block_until_ready(graph_convolution(x, adj, weight, bias=None))
    assert out_nb.shape == (B, N, Fout)
    assert jnp.allclose(out_nb, ref_nb, atol=1e-5, rtol=1e-5)

    # bias=True path.
    out_b = jax.block_until_ready(graph_convolution(x, adj, weight, bias=bias))
    assert jnp.allclose(out_b, ref_b, atol=1e-5, rtol=1e-5)

    # bf16-operand fast path (adj/support stored bf16, MXU bf16 operands, f32 acc).
    out_bf16 = jax.block_until_ready(
        graph_convolution(x, adj, weight, bias=bias, use_bf16_operands=True))
    assert jnp.allclose(out_bf16, ref_b, atol=1e-1, rtol=1e-1)

    print("KERNEL_OK")
</pallas_src>

<mosaic_0001>
module attributes {stable_mosaic.version = 11 : i64} {
  func.func @_support_kernel(%arg0: i32, %arg1: i32, %arg2: i32, %arg3: i32, %arg4: memref<1x128x128xf32, #tpu.memory_space<vmem>>, %arg5: memref<128x128xf32, #tpu.memory_space<vmem>>, %arg6: memref<1x128x128xf32, #tpu.memory_space<vmem>>, %arg7: memref<128x128xf32, #tpu.memory_space<vmem>>) attributes {dimension_semantics = [#tpu.dimension_semantics<parallel>, #tpu.dimension_semantics<parallel>, #tpu.dimension_semantics<parallel>, #tpu.dimension_semantics<arbitrary>], iteration_bounds = array<i64: 1, 1, 2, 1>, scalar_prefetch = 0 : i64, scratch_operands = 1 : i64, tpu.core_type = #tpu.core_type<tc>, window_params = [{transform_indices = @transform_0, window_bounds = array<i64: 1, 128, 128>}, {transform_indices = @transform_1, window_bounds = array<i64: 128, 128>}, {transform_indices = @transform_2, window_bounds = array<i64: 1, 128, 128>}]} {
    %c0_i32 = arith.constant 0 : i32
    %0 = arith.cmpi eq, %arg3, %c0_i32 : i32
    %1 = arith.extui %0 : i1 to i32
    %c0_i32_0 = arith.constant 0 : i32
    %2 = arith.cmpi ne, %1, %c0_i32_0 : i32
    scf.if %2 {
      %cst_11 = arith.constant 0.000000e+00 : f32
      %13 = vector.broadcast %cst_11 : f32 to vector<128x128xf32>
      %c0_12 = arith.constant 0 : index
      %c0_13 = arith.constant 0 : index
      %14 = vector.load %arg7[%c0_12, %c0_13] : memref<128x128xf32, #tpu.memory_space<vmem>>, vector<128x128xf32>
      tpu.vector_store %arg7[%c0_12, %c0_13], %13 {strides = array<i32>} : memref<128x128xf32, #tpu.memory_space<vmem>>, vector<128x128xf32>,
    } else {
    }
    %c0 = arith.constant 0 : index
    %c0_1 = arith.constant 0 : index
    %c0_2 = arith.constant 0 : index
    %3 = vector.load %arg4[%c0, %c0_1, %c0_2] : memref<1x128x128xf32, #tpu.memory_space<vmem>>, vector<1x128x128xf32>
    %4 = vector.shape_cast %3 : vector<1x128x128xf32> to vector<128x128xf32>
    %c0_3 = arith.constant 0 : index
    %c0_4 = arith.constant 0 : index
    %5 = vector.load %arg5[%c0_3, %c0_4] : memref<128x128xf32, #tpu.memory_space<vmem>>, vector<128x128xf32>
    %c0_5 = arith.constant 0 : index
    %c0_6 = arith.constant 0 : index
    %6 = vector.load %arg7[%c0_5, %c0_6] : memref<128x128xf32, #tpu.memory_space<vmem>>, vector<128x128xf32>
    %cst = arith.constant dense<0.000000e+00> : vector<128x128xf32>
    %7 = tpu.matmul %4, %5, %cst {dimension_numbers = #tpu.dot_dimension_numbers<[1], [0], [0], [1], [0, 0, 1, 1], [], []>} : vector<128x128xf32>, vector<128x128xf32>, vector<128x128xf32> -> vector<128x128xf32>
    %8 = arith.addf %6, %7 : vector<128x128xf32>
    %c0_7 = arith.constant 0 : index
    %c0_8 = arith.constant 0 : index
    %9 = vector.load %arg7[%c0_7, %c0_8] : memref<128x128xf32, #tpu.memory_space<vmem>>, vector<128x128xf32>
    tpu.vector_store %arg7[%c0_7, %c0_8], %8 {strides = array<i32>} : memref<128x128xf32, #tpu.memory_space<vmem>>, vector<128x128xf32>,
    %c0_i32_9 = arith.constant 0 : i32
    %10 = arith.cmpi eq, %arg3, %c0_i32_9 : i32
    %11 = arith.extui %10 : i1 to i32
    %c0_i32_10 = arith.constant 0 : i32
    %12 = arith.cmpi ne, %11, %c0_i32_10 : i32
    scf.if %12 {
      %c0_11 = arith.constant 0 : index
      %c0_12 = arith.constant 0 : index
      %13 = vector.load %arg7[%c0_11, %c0_12] : memref<128x128xf32, #tpu.memory_space<vmem>>, vector<128x128xf32>
      %c0_13 = arith.constant 0 : index
      %c0_14 = arith.constant 0 : index
      %c0_15 = arith.constant 0 : index
      %14 = vector.load %arg6[%c0_13, %c0_14, %c0_15] : memref<1x128x128xf32, #tpu.memory_space<vmem>>, vector<1x128x128xf32>
      %15 = vector.shape_cast %14 : vector<1x128x128xf32> to vector<128x128xf32>
      %16 = vector.shape_cast %13 : vector<128x128xf32> to vector<1x128x128xf32>
      tpu.vector_store %arg6[%c0_13, %c0_14, %c0_15], %16 {strides = array<i32>} : memref<1x128x128xf32, #tpu.memory_space<vmem>>, vector<1x128x128xf32>,
    } else {
    }
    return
  }
  func.func @transform_0(%arg0: i32, %arg1: i32, %arg2: i32, %arg3: i32) -> (i32, i32, i32) {
    %c0_i32 = arith.constant 0 : i32
    return %arg2, %arg0, %arg3 : i32, i32, i32
  }
  func.func @transform_1(%arg0: i32, %arg1: i32, %arg2: i32, %arg3: i32) -> (i32, i32) {
    %c0_i32 = arith.constant 0 : i32
    return %arg3, %arg1 : i32, i32
  }
  func.func @transform_2(%arg0: i32, %arg1: i32, %arg2: i32, %arg3: i32) -> (i32, i32, i32) {
    %c0_i32 = arith.constant 0 : i32
    return %arg2, %arg0, %arg1 : i32, i32, i32
  }
}

</mosaic_0001>

<llo_original>
// kernel: tpu_custom_call.1
$region0: #{tpu_custom_call.1}
  #allocation0 [shape = 'u32[]', space=smem, size = 0x4, offset = 0x4, fixed_abs, tag = 'smem constant byte address 0x4 - core index']
  #allocation1 [shape = 'u32[144,128]{1,0:T(1,128)}', space=vmem, size = 0x12000, scoped, tag = 'internal scratch']
  #allocation2 [shape = 'f32[128,128]{1,0:T(8,128)}', space=vmem, size = 0x10000, scoped, tag = 'scratch operand']
  %s0 = inlined_call_operand.hbm [shape: f32[2,128,128], index: 0, kind: input, shape index: {}]
  %s1 = inlined_call_operand.hbm [shape: f32[128,128], index: 1, kind: input, shape index: {}]
  %s2 = inlined_call_operand.hbm [shape: f32[2,128,128], index: 2, kind: output, shape index: {}]
  %s3 = sld [smem:[#allocation0]]
  $region57: #{tpu_custom_call.1} parent=0
    _
  %s5 = ssub.s32 1, %s3
  %s6 = scalar_select 0, %s5, %s3
  $region1: #{tpu_custom_call.1} parent=0
    #allocation3 [shape = 'u8[131072]{0}', space=vmem, size = 0x20000, scoped, tag = 'input window, operand 0']
    #allocation4 [shape = 's32[2]{0}', space=sflag, size = 0x8, scoped, tag = 'scoped memory for tpu_custom_call.1']
    #allocation5 [shape = 's32[2]{0}', space=sflag, size = 0x8, scoped, tag = 'scoped memory for tpu_custom_call.1']
    #allocation6 [shape = 'u8[65536]{0}', space=vmem, size = 0x10000, scoped, tag = 'input window, operand 1, single buffered']
    #allocation7 [shape = 's32[1]{0}', space=sflag, size = 0x4, scoped, tag = 'scoped memory for tpu_custom_call.1']
    #allocation8 [shape = 'u8[131072]{0}', space=vmem, size = 0x20000, scoped, tag = 'output window, operand 0']
    %7 = vsyncpa [#allocation4], 0
    %s8 = scalar_lea.sflag [#allocation4], 1
    %9 = vsyncpa %s8, 0
    %10 = vsyncpa [#allocation7], 0
    %11 = vsyncpa [#allocation5], 0
    %s12 = scalar_lea.sflag [#allocation5], 1
    %13 = vsyncpa %s12, 0
    loop: start=0, step=1, limit=4
    $region2: #{tpu_custom_call.1} parent=1 // loop_pre_header
      _
    $region3: #{tpu_custom_call.1} parent=1 // loop_header
      %s15 = sphi 0, %s19
      %p16 = scmp.ge.s32.totalorder %s15, 4
      %s22 = sphi 0, %s48
      %s23 = sphi 0, %s44
      %s24 = sphi 0, %s40
      %s25 = sphi 0, %s36
      %s26 = sphi 0, %s22
      %s27 = sphi 0, %s23
      %s28 = sphi 0, %s24
      %s29 = sphi 0, %s25
      %s30 = sphi 0, %s26
      %s31 = sphi 0, %s27
      %s32 = sphi 0, %s28
      %s33 = sphi 0, %s29
      %s55 = sphi 0, %s57
      %s58 = sphi 0, %s55
      %s59 = sphi 0, %s58
      %s75 = sphi 0, %s59
      %s83 = sphi 0, %s85
      %s86 = sphi 0, %s83
      %s87 = sphi 0, %s86
      %s103 = sphi 0, %s87
      %s113 = sphi 0, %s115
      %s116 = sphi 0, %s113
      %s117 = sphi 0, %s116
      %s133 = sphi 0, %s117
    $region4: #{tpu_custom_call.1} parent=1 // loop_header_branch
      %18 = sbr.rel (%p16) target = $region8
    $region5: #{tpu_custom_call.1} parent=1 // loop_body
      %s20 = ssub.s32 %s15, 1
      %s21 = ssub.s32 %s15, 2
      %s34 = sadd.s32 1, %s25
      %p35 = scmp.ge.s32.totalorder %s34, 1
      %s36 = scalar_select %p35, 0, %s34
      %s37 = sadd.s32 1, %s24
      %s38 = scalar_select %p35, %s37, %s24
      %p39 = scmp.ge.s32.totalorder %s38, 2
      %s40 = scalar_select %p39, 0, %s38
      %s41 = sadd.s32 1, %s23
      %s42 = scalar_select %p39, %s41, %s23
      %p43 = scmp.ge.s32.totalorder %s42, 1
      %s44 = scalar_select %p43, 0, %s42
      %s45 = sadd.s32 1, %s22
      %s46 = scalar_select %p43, %s45, %s22
      %p47 = scmp.ge.s32.totalorder %s46, 1
      %s48 = scalar_select %p47, 0, %s46
      %s49 = ssub.s32 %s24, %s40
      %s50 = ssub.s32 %s22, %s48
      %s51 = sor.u32 %s49, %s50
      %s52 = ssub.s32 %s25, %s36
      %s53 = sor.u32 %s51, %s52
      %p54 = scmp.eq.s32.totalorder %s53, 0
      %s56 = sadd.s32 %s55, 1
      %s57 = scalar_select %p54, %s55, %s56
      %p60 = pneg %p54
      %p61 = scmp.eq.s32.totalorder %s15, 1
      %p62 = por %p60, %p61
      %p63 = scmp.ne.s32.totalorder %s55, %s58
      %p64 = scmp.eq.s32.totalorder %s15, 0
      %p65 = por %p63, %p64
      %p66 = scmp.ne.s32.totalorder %s55, %s58
      %p67 = scmp.eq.s32.totalorder %s20, 1
      %p68 = por %p66, %p67
      %p69 = scmp.ne.s32.totalorder %s58, %s59
      %p70 = scmp.eq.s32.totalorder %s20, 0
      %p71 = por %p69, %p70
      %p72 = scmp.ne.s32.totalorder %s58, %s59
      %p73 = scmp.eq.s32.totalorder %s21, 1
      %p74 = por %p72, %p73
      %p76 = scmp.ne.s32.totalorder %s59, %s75
      %p77 = scmp.eq.s32.totalorder %s21, 0
      %p78 = por %p76, %p77
      %s79 = ssub.s32 %s25, %s36
      %s80 = ssub.s32 %s23, %s44
      %s81 = sor.u32 %s79, %s80
      %p82 = scmp.eq.s32.totalorder %s81, 0
      %s84 = sadd.s32 %s83, 1
      %s85 = scalar_select %p82, %s83, %s84
      %p88 = pneg %p82
      %p89 = scmp.eq.s32.totalorder %s15, 1
      %p90 = por %p88, %p89
      %p91 = scmp.ne.s32.totalorder %s83, %s86
      %p92 = scmp.eq.s32.totalorder %s15, 0
      %p93 = por %p91, %p92
      %p94 = scmp.ne.s32.totalorder %s83, %s86
      %p95 = scmp.eq.s32.totalorder %s20, 1
      %p96 = por %p94, %p95
      %p97 = scmp.ne.s32.totalorder %s86, %s87
      %p98 = scmp.eq.s32.totalorder %s20, 0
      %p99 = por %p97, %p98
      %p100 = scmp.ne.s32.totalorder %s86, %s87
      %p101 = scmp.eq.s32.totalorder %s21, 1
      %p102 = por %p100, %p101
      %p104 = scmp.ne.s32.totalorder %s87, %s103
      %p105 = scmp.eq.s32.totalorder %s21, 0
      %p106 = por %p104, %p105
      %s107 = ssub.s32 %s24, %s40
      %s108 = ssub.s32 %s22, %s48
      %s109 = sor.u32 %s107, %s108
      %s110 = ssub.s32 %s23, %s44
      %s111 = sor.u32 %s109, %s110
      %p112 = scmp.eq.s32.totalorder %s111, 0
      %s114 = sadd.s32 %s113, 1
      %s115 = scalar_select %p112, %s113, %s114
      %p118 = pneg %p112
      %p119 = scmp.eq.s32.totalorder %s15, 1
      %p120 = por %p118, %p119
      %p121 = scmp.ne.s32.totalorder %s113, %s116
      %p122 = scmp.eq.s32.totalorder %s15, 0
      %p123 = por %p121, %p122
      %p124 = scmp.ne.s32.totalorder %s113, %s116
      %p125 = scmp.eq.s32.totalorder %s20, 1
      %p126 = por %p124, %p125
      %p127 = scmp.ne.s32.totalorder %s116, %s117
      %p128 = scmp.eq.s32.totalorder %s20, 0
      %p129 = por %p127, %p128
      %p130 = scmp.ne.s32.totalorder %s116, %s117
      %p131 = scmp.eq.s32.totalorder %s21, 1
      %p132 = por %p130, %p131
      %p134 = scmp.ne.s32.totalorder %s117, %s133
      %p135 = scmp.eq.s32.totalorder %s21, 0
      %p136 = por %p134, %p135
      %p137 = scmp.le.s32.totalorder 1, %s15
      %p138 = scmp.lt.s32.totalorder %s15, 3
      %p139 = pnand %p137, %p138
      %p140 = pneg %p139
      // Predicated region
      $region9: #{tpu_custom_call.1} parent=5 // pred_check
        _
      $region10: #{tpu_custom_call.1} parent=5 // pred_check_branch
        %142 = sbr.rel (%p139) target = $region12
      $region11: #{tpu_custom_call.1} parent=5 // pred_region
        %s143 = ssub.s32 %s15, 1
        // Predicated region
        $region13: #{tpu_custom_call.1} parent=11 // pred_check
          %p144 = pneg %p99
        $region14: #{tpu_custom_call.1} parent=11 // pred_check_branch
          %146 = sbr.rel (%p144) target = $region16
        $region15: #{tpu_custom_call.1} parent=11 // pred_region
          %s147 = smul.u32 16, %s29
          %s149 = ssub.s32 2048, 2048
          %150 = vsyncadd [#allocation7], %s149
          %s151 = sadd.s32 %s27, %s147
          %s152 = smul.addr %s151, 128
          %s153 = scalar_lea.hbm %s1, %s152
          %s154 = sshll.u32 [#allocation6], 4
          %s155 = int_to_ptr.vmem [resolvable:$true] %s154
          %160 = dma.hbm_to_vmem [thread:$0]  %s153, 2048, %s155, [#allocation7], 128, 128, 8
        $region16: #{tpu_custom_call.1} parent=11 // pred_fallthru
          _
      $region12: #{tpu_custom_call.1} parent=5 // pred_fallthru
        _
      %p161 = scmp.lt.s32.totalorder %s15, 2
      // Predicated region
      $region17: #{tpu_custom_call.1} parent=5 // pred_check
        %p162 = pneg %p161
      $region18: #{tpu_custom_call.1} parent=5 // pred_check_branch
        %164 = sbr.rel (%p162) target = $region20
      $region19: #{tpu_custom_call.1} parent=5 // pred_region
        // Predicated region
        $region21: #{tpu_custom_call.1} parent=19 // pred_check
          %p165 = pneg %p65
        $region22: #{tpu_custom_call.1} parent=19 // pred_check_branch
          %167 = sbr.rel (%p165) target = $region24
        $region23: #{tpu_custom_call.1} parent=19 // pred_region
          %s168 = sand.u32 %s55, 1
          %s169 = scalar_lea.sflag [#allocation4], %s168
          %s170 = sand.u32 %s55, 1
          %s171 = smul.addr %s170, 128
          %s172 = scalar_lea.vmem [#allocation3], %s171
          %s173 = smul.u32 16, %s22
          %s175 = ssub.s32 2048, 2048
          %176 = vsyncadd %s169, %s175
          %s177 = sadd.s32 %s25, %s173
          %s178 = smul.addr %s24, 16
          %s179 = sadd.s32 %s177, %s178
          %s180 = smul.addr %s179, 128
          %s181 = scalar_lea.hbm %s0, %s180
          %s182 = sshll.u32 %s172, 4
          %s183 = int_to_ptr.vmem [resolvable:$true] %s182
          %188 = dma.hbm_to_vmem [thread:$0]  %s181, 2048, %s183, %s169, 128, 128, 8
        $region24: #{tpu_custom_call.1} parent=19 // pred_fallthru
          _
      $region20: #{tpu_custom_call.1} parent=5 // pred_fallthru
        _
      %p189 = scmp.le.s32.totalorder 1, %s15
      %p190 = scmp.lt.s32.totalorder %s15, 3
      %p191 = pnand %p189, %p190
      %p192 = pneg %p191
      // Predicated region
      $region25: #{tpu_custom_call.1} parent=5 // pred_check
        _
      $region26: #{tpu_custom_call.1} parent=5 // pred_check_branch
        %194 = sbr.rel (%p191) target = $region28
      $region27: #{tpu_custom_call.1} parent=5 // pred_region
        %s195 = ssub.s32 %s15, 1
        %s196 = sand.u32 %s58, 1
        %s197 = scalar_lea.sflag [#allocation4], %s196
        %s198 = sand.u32 %s58, 1
        %s199 = smul.addr %s198, 128
        %s200 = scalar_lea.vmem [#allocation3], %s199
        // Predicated region
        $region29: #{tpu_custom_call.1} parent=27 // pred_check
          %p201 = pneg %p71
        $region30: #{tpu_custom_call.1} parent=27 // pred_check_branch
          %203 = sbr.rel (%p201) target = $region32
        $region31: #{tpu_custom_call.1} parent=27 // pred_region
          %204 = dma.done %s197, 2048
        $region32: #{tpu_custom_call.1} parent=27 // pred_fallthru
          _
        // Predicated region
        $region33: #{tpu_custom_call.1} parent=27 // pred_check
          %p205 = pneg %p99
        $region34: #{tpu_custom_call.1} parent=27 // pred_check_branch
          %207 = sbr.rel (%p205) target = $region36
        $region35: #{tpu_custom_call.1} parent=27 // pred_region
          %208 = dma.done [#allocation7], 2048
        $region36: #{tpu_custom_call.1} parent=27 // pred_fallthru
          _
        %s209 = sand.u32 %s58, 1
        %s210 = scalar_lea.sflag [#allocation4], %s209
        %s211 = sand.u32 %s58, 1
        %s212 = smul.addr %s211, 128
        %s213 = scalar_lea.vmem [#allocation3], %s212
        %p214 = pneg %p71
        %p215 = pneg %p68
        %p216 = pneg %p99
        %p217 = pneg %p96
        %p218 = pneg %p129
        %p219 = pneg %p126
        %s220 = sand.u32 %s116, 1
        %s221 = scalar_lea.sflag [#allocation5], %s220
        %s222 = sand.u32 %s116, 1
        %s223 = smul.addr %s222, 128
        %s224 = scalar_lea.vmem [#allocation8], %s223
        %s225 = smul.u32 16, %s26
        %s226 = smul.u32 16, %s29
        %s227 = smul.u32 16, %s26
        %p228 = scmp.eq.s32.totalorder %s29, 0
        // Predicated region
        $region37: #{tpu_custom_call.1} parent=27 // pred_check
          %p229 = pneg %p228
        $region38: #{tpu_custom_call.1} parent=27 // pred_check_branch
          %231 = sbr.rel (%p229) target = $region40
        $region39: #{tpu_custom_call.1} parent=27 // pred_region
          %232 = vst [vmem:[#allocation2] sm:$0xff] 0.0
          %233 = vst [vmem:[#allocation2 + $0x8] sm:$0xff] 0.0
          %234 = vst [vmem:[#allocation2 + $0x10] sm:$0xff] 0.0
          %235 = vst [vmem:[#allocation2 + $0x18] sm:$0xff] 0.0
          %236 = vst [vmem:[#allocation2 + $0x20] sm:$0xff] 0.0
          %237 = vst [vmem:[#allocation2 + $0x28] sm:$0xff] 0.0
          %238 = vst [vmem:[#allocation2 + $0x30] sm:$0xff] 0.0
          %239 = vst [vmem:[#allocation2 + $0x38] sm:$0xff] 0.0
          %240 = vst [vmem:[#allocation2 + $0x40] sm:$0xff] 0.0
          %241 = vst [vmem:[#allocation2 + $0x48] sm:$0xff] 0.0
          %242 = vst [vmem:[#allocation2 + $0x50] sm:$0xff] 0.0
          %243 = vst [vmem:[#allocation2 + $0x58] sm:$0xff] 0.0
          %244 = vst [vmem:[#allocation2 + $0x60] sm:$0xff] 0.0
          %245 = vst [vmem:[#allocation2 + $0x68] sm:$0xff] 0.0
          %246 = vst [vmem:[#allocation2 + $0x70] sm:$0xff] 0.0
          %247 = vst [vmem:[#allocation2 + $0x78] sm:$0xff] 0.0
        $region40: #{tpu_custom_call.1} parent=27 // pred_fallthru
          _
        %v248 = vld [vmem:[%s200] sm:$0xff]
        %v249 = vld [vmem:[%s200 + $0x8] sm:$0xff]
        %v250 = vld [vmem:[%s200 + $0x10] sm:$0xff]
        %v251 = vld [vmem:[%s200 + $0x18] sm:$0xff]
        %v252 = vld [vmem:[%s200 + $0x20] sm:$0xff]
        %v253 = vld [vmem:[%s200 + $0x28] sm:$0xff]
        %v254 = vld [vmem:[%s200 + $0x30] sm:$0xff]
        %v255 = vld [vmem:[%s200 + $0x38] sm:$0xff]
        %v256 = vld [vmem:[%s200 + $0x40] sm:$0xff]
        %v257 = vld [vmem:[%s200 + $0x48] sm:$0xff]
        %v258 = vld [vmem:[%s200 + $0x50] sm:$0xff]
        %v259 = vld [vmem:[%s200 + $0x58] sm:$0xff]
        %v260 = vld [vmem:[%s200 + $0x60] sm:$0xff]
        %v261 = vld [vmem:[%s200 + $0x68] sm:$0xff]
        %v262 = vld [vmem:[%s200 + $0x70] sm:$0xff]
        %v263 = vld [vmem:[%s200 + $0x78] sm:$0xff]
        %v264 = vld [vmem:[#allocation6] sm:$0xff]
        %v265 = vld [vmem:[#allocation6 + $0x8] sm:$0xff]
        %v266 = vld [vmem:[#allocation6 + $0x10] sm:$0xff]
        %v267 = vld [vmem:[#allocation6 + $0x18] sm:$0xff]
        %v268 = vld [vmem:[#allocation6 + $0x20] sm:$0xff]
        %v269 = vld [vmem:[#allocation6 + $0x28] sm:$0xff]
        %v270 = vld [vmem:[#allocation6 + $0x30] sm:$0xff]
        %v271 = vld [vmem:[#allocation6 + $0x38] sm:$0xff]
        %v272 = vld [vmem:[#allocation6 + $0x40] sm:$0xff]
        %v273 = vld [vmem:[#allocation6 + $0x48] sm:$0xff]
        %v274 = vld [vmem:[#allocation6 + $0x50] sm:$0xff]
        %v275 = vld [vmem:[#allocation6 + $0x58] sm:$0xff]
        %v276 = vld [vmem:[#allocation6 + $0x60] sm:$0xff]
        %v277 = vld [vmem:[#allocation6 + $0x68] sm:$0xff]
        %v278 = vld [vmem:[#allocation6 + $0x70] sm:$0xff]
        %v279 = vld [vmem:[#allocation6 + $0x78] sm:$0xff]
        %v280 = vld [vmem:[#allocation2] sm:$0xff]
        %v281 = vld [vmem:[#allocation2 + $0x8] sm:$0xff]
        %v282 = vld [vmem:[#allocation2 + $0x10] sm:$0xff]
        %v283 = vld [vmem:[#allocation2 + $0x18] sm:$0xff]
        %v284 = vld [vmem:[#allocation2 + $0x20] sm:$0xff]
        %v285 = vld [vmem:[#allocation2 + $0x28] sm:$0xff]
        %v286 = vld [vmem:[#allocation2 + $0x30] sm:$0xff]
        %v287 = vld [vmem:[#allocation2 + $0x38] sm:$0xff]
        %v288 = vld [vmem:[#allocation2 + $0x40] sm:$0xff]
        %v289 = vld [vmem:[#allocation2 + $0x48] sm:$0xff]
        %v290 = vld [vmem:[#allocation2 + $0x50] sm:$0xff]
        %v291 = vld [vmem:[#allocation2 + $0x58] sm:$0xff]
        %v292 = vld [vmem:[#allocation2 + $0x60] sm:$0xff]
        %v293 = vld [vmem:[#allocation2 + $0x68] sm:$0xff]
        %v294 = vld [vmem:[#allocation2 + $0x70] sm:$0xff]
        %v295 = vld [vmem:[#allocation2 + $0x78] sm:$0xff]
        %296 = vmatprep.subr.mxu0 0.0
        %297 = vmatpush1.msra.mxu0 %v264
        %298 = vmatprep.subr.mxu0 0.0
        %299 = vmatpush1.msra.mxu0 %v265
        %300 = vmatprep.subr.mxu0 0.0
        %301 = vmatpush1.msra.mxu0 %v266
        %302 = vmatprep.subr.mxu0 0.0
        %303 = vmatpush1.msra.mxu0 %v267
        %304 = vmatprep.subr.mxu0 0.0
        %305 = vmatpush1.msra.mxu0 %v268
        %306 = vmatprep.subr.mxu0 0.0
        %307 = vmatpush1.msra.mxu0 %v269
        %308 = vmatprep.subr.mxu0 0.0
        %309 = vmatpush1.msra.mxu0 %v270
        %310 = vmatprep.subr.mxu0 0.0
        %311 = vmatpush1.msra.mxu0 %v271
        %312 = vmatprep.subr.mxu0 0.0
        %313 = vmatpush1.msra.mxu0 %v272
        %314 = vmatprep.subr.mxu0 0.0
        %315 = vmatpush1.msra.mxu0 %v273
        %316 = vmatprep.subr.mxu0 0.0
        %317 = vmatpush1.msra.mxu0 %v274
        %318 = vmatprep.subr.mxu0 0.0
        %319 = vmatpush1.msra.mxu0 %v275
        %320 = vmatprep.subr.mxu0 0.0
        %321 = vmatpush1.msra.mxu0 %v276
        %322 = vmatprep.subr.mxu0 0.0
        %323 = vmatpush1.msra.mxu0 %v277
        %324 = vmatprep.subr.mxu0 0.0
        %325 = vmatpush1.msra.mxu0 %v278
        %326 = vmatprep.subr.mxu0 0.0
        %327 = vmatpush1.msra.mxu0 %v279
        %328 = vmatprep.subr.mxu0 0.0
        %329 = vmatpush1.msra.mxu0 0.0
        %330 = vmatprep.subr.mxu0 0.0
        %331 = vmatpush1.msra.mxu0 0.0
        %332 = vmatprep.subr.mxu0 0.0
        %333 = vmatpush1.msra.mxu0 0.0
        %334 = vmatprep.subr.mxu0 0.0
        %335 = vmatpush1.msra.mxu0 0.0
        %336 = vmatprep.subr.mxu0 0.0
        %337 = vmatpush1.msra.mxu0 0.0
        %338 = vmatprep.subr.mxu0 0.0
        %339 = vmatpush1.msra.mxu0 0.0
        %340 = vmatprep.subr.mxu0 0.0
        %341 = vmatpush1.msra.mxu0 0.0
        %342 = vmatprep.subr.mxu0 0.0
        %343 = vmatpush1.msra.mxu0 0.0
        %344 = vmatprep.subr.mxu0 0.0
        %345 = vmatpush1.msra.mxu0 0.0
        %346 = vmatprep.subr.mxu0 0.0
        %347 = vmatpush1.msra.mxu0 0.0
        %348 = vmatprep.subr.mxu0 0.0
        %349 = vmatpush1.msra.mxu0 0.0
        %350 = vmatprep.subr.mxu0 0.0
        %351 = vmatpush1.msra.mxu0 0.0
        %352 = vmatprep.subr.mxu0 0.0
        %353 = vmatpush1.msra.mxu0 0.0
        %354 = vmatprep.subr.mxu0 0.0
        %355 = vmatpush1.msra.mxu0 0.0
        %356 = vmatprep.subr.mxu0 0.0
        %357 = vmatpush1.msra.mxu0 0.0
        %358 = vmatprep.subr.mxu0 0.0
        %359 = vmatpush1.msra.mxu0 0.0
        %360 = vmatprep.mubr.f32.mxu0 0.0
        %361 = vmatmul.mubr.f32.gmra.mrb[0].mxu0 %v248
        %v362 = vpop.f32.mrb[0].mxu0
        %v363 = vadd.f32 0.0, %v362
        %v364 = vpop.f32.mrb[0].mxu0
        %365 = vmatprep.mubr.f32.mxu0 0.0
        %366 = vmatmul.mubr.f32.gmra.mrb[0].mxu0 %v249
        %v367 = vpop.f32.mrb[0].mxu0
        %v368 = vadd.f32 0.0, %v367
        %v369 = vpop.f32.mrb[0].mxu0
        %370 = vmatprep.mubr.f32.mxu0 0.0
        %371 = vmatmul.mubr.f32.gmra.mrb[0].mxu0 %v250
        %v372 = vpop.f32.mrb[0].mxu0
        %v373 = vadd.f32 0.0, %v372
        %v374 = vpop.f32.mrb[0].mxu0
        %375 = vmatprep.mubr.f32.mxu0 0.0
        %376 = vmatmul.mubr.f32.gmra.mrb[0].mxu0 %v251
        %v377 = vpop.f32.mrb[0].mxu0
        %v378 = vadd.f32 0.0, %v377
        %v379 = vpop.f32.mrb[0].mxu0
        %380 = vmatprep.mubr.f32.mxu0 0.0
        %381 = vmatmul.mubr.f32.gmra.mrb[0].mxu0 %v252
        %v382 = vpop.f32.mrb[0].mxu0
        %v383 = vadd.f32 0.0, %v382
        %v384 = vpop.f32.mrb[0].mxu0
        %385 = vmatprep.mubr.f32.mxu0 0.0
        %386 = vmatmul.mubr.f32.gmra.mrb[0].mxu0 %v253
        %v387 = vpop.f32.mrb[0].mxu0
        %v388 = vadd.f32 0.0, %v387
        %v389 = vpop.f32.mrb[0].mxu0
        %390 = vmatprep.mubr.f32.mxu0 0.0
        %391 = vmatmul.mubr.f32.gmra.mrb[0].mxu0 %v254
        %v392 = vpop.f32.mrb[0].mxu0
        %v393 = vadd.f32 0.0, %v392
        %v394 = vpop.f32.mrb[0].mxu0
        %395 = vmatprep.mubr.f32.mxu0 0.0
        %396 = vmatmul.mubr.f32.gmra.mrb[0].mxu0 %v255
        %v397 = vpop.f32.mrb[0].mxu0
        %v398 = vadd.f32 0.0, %v397
        %v399 = vpop.f32.mrb[0].mxu0
        %400 = vmatprep.mubr.f32.mxu0 0.0
        %401 = vmatmul.mubr.f32.gmra.mrb[0].mxu0 %v256
        %v402 = vpop.f32.mrb[0].mxu0
        %v403 = vadd.f32 0.0, %v402
        %v404 = vpop.f32.mrb[0].mxu0
        %405 = vmatprep.mubr.f32.mxu0 0.0
        %406 = vmatmul.mubr.f32.gmra.mrb[0].mxu0 %v257
        %v407 = vpop.f32.mrb[0].mxu0
        %v408 = vadd.f32 0.0, %v407
        %v409 = vpop.f32.mrb[0].mxu0
        %410 = vmatprep.mubr.f32.mxu0 0.0
        %411 = vmatmul.mubr.f32.gmra.mrb[0].mxu0 %v258
        %v412 = vpop.f32.mrb[0].mxu0
        %v413 = vadd.f32 0.0, %v412
        %v414 = vpop.f32.mrb[0].mxu0
        %415 = vmatprep.mubr.f32.mxu0 0.0
        %416 = vmatmul.mubr.f32.gmra.mrb[0].mxu0 %v259
        %v417 = vpop.f32.mrb[0].mxu0
        %v418 = vadd.f32 0.0, %v417
        %v419 = vpop.f32.mrb[0].mxu0
        %420 = vmatprep.mubr.f32.mxu0 0.0
        %421 = vmatmul.mubr.f32.gmra.mrb[0].mxu0 %v260
        %v422 = vpop.f32.mrb[0].mxu0
        %v423 = vadd.f32 0.0, %v422
        %v424 = vpop.f32.mrb[0].mxu0
        %425 = vmatprep.mubr.f32.mxu0 0.0
        %426 = vmatmul.mubr.f32.gmra.mrb[0].mxu0 %v261
        %v427 = vpop.f32.mrb[0].mxu0
        %v428 = vadd.f32 0.0, %v427
        %v429 = vpop.f32.mrb[0].mxu0
        %430 = vmatprep.mubr.f32.mxu0 0.0
        %431 = vmatmul.mubr.f32.gmra.mrb[0].mxu0 %v262
        %v432 = vpop.f32.mrb[0].mxu0
        %v433 = vadd.f32 0.0, %v432
        %v434 = vpop.f32.mrb[0].mxu0
        %435 = vmatprep.mubr.f32.mxu0 0.0
        %436 = vmatmul.mubr.f32.gmra.mrb[0].mxu0 %v263
        %v437 = vpop.f32.mrb[0].mxu0
        %v438 = vadd.f32 0.0, %v437
        %v439 = vpop.f32.mrb[0].mxu0
        %440 = vdwg.mxu0
        %v441 = vadd.f32 %v280, %v363
        %v442 = vadd.f32 %v281, %v368
        %v443 = vadd.f32 %v282, %v373
        %v444 = vadd.f32 %v283, %v378
        %v445 = vadd.f32 %v284, %v383
        %v446 = vadd.f32 %v285, %v388
        %v447 = vadd.f32 %v286, %v393
        %v448 = vadd.f32 %v287, %v398
        %v449 = vadd.f32 %v288, %v403
        %v450 = vadd.f32 %v289, %v408
        %v451 = vadd.f32 %v290, %v413
        %v452 = vadd.f32 %v291, %v418
        %v453 = vadd.f32 %v292, %v423
        %v454 = vadd.f32 %v293, %v428
        %v455 = vadd.f32 %v294, %v433
        %v456 = vadd.f32 %v295, %v438
        %457 = vst [vmem:[#allocation2] sm:$0xff] %v441
        %458 = vst [vmem:[#allocation2 + $0x8] sm:$0xff] %v442
        %459 = vst [vmem:[#allocation2 + $0x10] sm:$0xff] %v443
        %460 = vst [vmem:[#allocation2 + $0x18] sm:$0xff] %v444
        %461 = vst [vmem:[#allocation2 + $0x20] sm:$0xff] %v445
        %462 = vst [vmem:[#allocation2 + $0x28] sm:$0xff] %v446
        %463 = vst [vmem:[#allocation2 + $0x30] sm:$0xff] %v447
        %464 = vst [vmem:[#allocation2 + $0x38] sm:$0xff] %v448
        %465 = vst [vmem:[#allocation2 + $0x40] sm:$0xff] %v449
        %466 = vst [vmem:[#allocation2 + $0x48] sm:$0xff] %v450
        %467 = vst [vmem:[#allocation2 + $0x50] sm:$0xff] %v451
        %468 = vst [vmem:[#allocation2 + $0x58] sm:$0xff] %v452
        %469 = vst [vmem:[#allocation2 + $0x60] sm:$0xff] %v453
        %470 = vst [vmem:[#allocation2 + $0x68] sm:$0xff] %v454
        %471 = vst [vmem:[#allocation2 + $0x70] sm:$0xff] %v455
        %472 = vst [vmem:[#allocation2 + $0x78] sm:$0xff] %v456
        // Predicated region
        $region41: #{tpu_custom_call.1} parent=27 // pred_check
          %p473 = pneg %p228
        $region42: #{tpu_custom_call.1} parent=27 // pred_check_branch
          %475 = sbr.rel (%p473) target = $region44
        $region43: #{tpu_custom_call.1} parent=27 // pred_region
          %v476 = vld [vmem:[#allocation2] sm:$0xff]
          %v477 = vld [vmem:[#allocation2 + $0x8] sm:$0xff]
          %v478 = vld [vmem:[#allocation2 + $0x10] sm:$0xff]
          %v479 = vld [vmem:[#allocation2 + $0x18] sm:$0xff]
          %v480 = vld [vmem:[#allocation2 + $0x20] sm:$0xff]
          %v481 = vld [vmem:[#allocation2 + $0x28] sm:$0xff]
          %v482 = vld [vmem:[#allocation2 + $0x30] sm:$0xff]
          %v483 = vld [vmem:[#allocation2 + $0x38] sm:$0xff]
          %v484 = vld [vmem:[#allocation2 + $0x40] sm:$0xff]
          %v485 = vld [vmem:[#allocation2 + $0x48] sm:$0xff]
          %v486 = vld [vmem:[#allocation2 + $0x50] sm:$0xff]
          %v487 = vld [vmem:[#allocation2 + $0x58] sm:$0xff]
          %v488 = vld [vmem:[#allocation2 + $0x60] sm:$0xff]
          %v489 = vld [vmem:[#allocation2 + $0x68] sm:$0xff]
          %v490 = vld [vmem:[#allocation2 + $0x70] sm:$0xff]
          %v491 = vld [vmem:[#allocation2 + $0x78] sm:$0xff]
          %492 = vst [vmem:[%s224] sm:$0xff] %v476
          %493 = vst [vmem:[%s224 + $0x8] sm:$0xff] %v477
          %494 = vst [vmem:[%s224 + $0x10] sm:$0xff] %v478
          %495 = vst [vmem:[%s224 + $0x18] sm:$0xff] %v479
          %496 = vst [vmem:[%s224 + $0x20] sm:$0xff] %v480
          %497 = vst [vmem:[%s224 + $0x28] sm:$0xff] %v481
          %498 = vst [vmem:[%s224 + $0x30] sm:$0xff] %v482
          %499 = vst [vmem:[%s224 + $0x38] sm:$0xff] %v483
          %500 = vst [vmem:[%s224 + $0x40] sm:$0xff] %v484
          %501 = vst [vmem:[%s224 + $0x48] sm:$0xff] %v485
          %502 = vst [vmem:[%s224 + $0x50] sm:$0xff] %v486
          %503 = vst [vmem:[%s224 + $0x58] sm:$0xff] %v487
          %504 = vst [vmem:[%s224 + $0x60] sm:$0xff] %v488
          %505 = vst [vmem:[%s224 + $0x68] sm:$0xff] %v489
          %506 = vst [vmem:[%s224 + $0x70] sm:$0xff] %v490
          %507 = vst [vmem:[%s224 + $0x78] sm:$0xff] %v491
        $region44: #{tpu_custom_call.1} parent=27 // pred_fallthru
          _
        %s508 = sand.u32 %s116, 1
        %s509 = scalar_lea.sflag [#allocation5], %s508
        %s510 = sand.u32 %s116, 1
        %s511 = smul.addr %s510, 128
        %s512 = scalar_lea.vmem [#allocation8], %s511
        // Predicated region
        $region45: #{tpu_custom_call.1} parent=27 // pred_check
          %p513 = pneg %p126
        $region46: #{tpu_custom_call.1} parent=27 // pred_check_branch
          %515 = sbr.rel (%p513) target = $region48
        $region47: #{tpu_custom_call.1} parent=27 // pred_region
          %s516 = smul.u32 16, %s26
          %s518 = ssub.s32 2048, 2048
          %519 = vsyncadd %s509, %s518
          %s520 = sadd.s32 %s27, %s516
          %s521 = smul.addr %s28, 16
          %s522 = sadd.s32 %s520, %s521
          %s523 = smul.addr %s522, 128
          %s524 = scalar_lea.hbm %s2, %s523
          %s525 = sshll.u32 %s512, 4
          %s526 = int_to_ptr.vmem [resolvable:$true] %s525
          %531 = dma.vmem_to_hbm [thread:$0]  %s526, 2048, %s524, %s509, 128, 128, 8
        $region48: #{tpu_custom_call.1} parent=27 // pred_fallthru
          _
      $region28: #{tpu_custom_call.1} parent=5 // pred_fallthru
        _
      %p532 = scmp.le.s32.totalorder 2, %s15
      // Predicated region
      $region49: #{tpu_custom_call.1} parent=5 // pred_check
        %p533 = pneg %p532
      $region50: #{tpu_custom_call.1} parent=5 // pred_check_branch
        %535 = sbr.rel (%p533) target = $region52
      $region51: #{tpu_custom_call.1} parent=5 // pred_region
        %s536 = ssub.s32 %s15, 2
        // Predicated region
        $region53: #{tpu_custom_call.1} parent=51 // pred_check
          %p537 = pneg %p132
        $region54: #{tpu_custom_call.1} parent=51 // pred_check_branch
          %539 = sbr.rel (%p537) target = $region56
        $region55: #{tpu_custom_call.1} parent=51 // pred_region
          %s540 = sand.u32 %s117, 1
          %s541 = scalar_lea.sflag [#allocation5], %s540
          %s542 = sand.u32 %s117, 1
          %s543 = smul.addr %s542, 128
          %s544 = scalar_lea.vmem [#allocation8], %s543
          %545 = dma.done %s541, 2048
        $region56: #{tpu_custom_call.1} parent=51 // pred_fallthru
          _
      $region52: #{tpu_custom_call.1} parent=5 // pred_fallthru
        _
    $region6: #{tpu_custom_call.1} parent=1 // loop_footer
      %s19 = sadd.s32 1, %s15
    $region7: #{tpu_custom_call.1} parent=1 // loop_footer_branch
      %14 = sbr.rel target = $region3
    $region8: #{tpu_custom_call.1} parent=1 // loop_exit
      _
    %546 = vsyncpa [#allocation4], 1
    %s547 = scalar_lea.sflag [#allocation4], 1
    %548 = vsyncpa %s547, 1
    %549 = vsyncpa [#allocation7], 1
    %550 = vsyncpa [#allocation5], 1
    %s551 = scalar_lea.sflag [#allocation5], 1
    %552 = vsyncpa %s551, 1

</llo_original>
